<compile_context>
chip_gen: v7x
topology: tpu7x:2x2x1
jax: 0.10.0
libtpu: 0.0.40
codegen_flags: <defaults>
</compile_context>

<pallas_src>
import functools

import jax
import jax.numpy as jnp
from jax.experimental import pallas as pl
from jax.experimental.pallas import tpu as pltpu

NEG_SLOPE = 0.01                    # torch.nn.LeakyReLU default
LANE = 128                          # lane width / feature padding
TILE_NODES = 256                    # node tile for large graphs (v6e/v7x MXU friendly)
VMEM_LIMIT = 32 * 1024 * 1024       # explicit, comfortably fits v5e/v6e/v7x


def _round_up(x, m):
    return ((x + m - 1) // m) * m


def _leaky_relu(h):
    return jnp.where(h > 0, h, NEG_SLOPE * h)


# ----------------------------------------------------------------------------
# Kernels
# ----------------------------------------------------------------------------
def xw_kernel(h_ref, w_ref, o_ref):
    """One node row-tile of XW = H @ W (MXU, f32 accumulate)."""
    o_ref[...] = jnp.dot(h_ref[...], w_ref[...],
                         preferred_element_type=jnp.float32)


def aggregate_kernel(a_ref, xw_ref, b_ref, o_ref, acc_ref):
    """One (row-tile i, reduction-tile k) step of LReLU(A_hat @ XW + b)."""
    k = pl.program_id(1)

    @pl.when(k == 0)
    def _():
        acc_ref[...] = jnp.zeros_like(acc_ref)

    # A_hat streamed as bf16 to halve HBM traffic; upcast in-register, f32 MXU acc.
    a = a_ref[...].astype(jnp.float32)
    acc_ref[...] += jnp.dot(a, xw_ref[...], preferred_element_type=jnp.float32)

    @pl.when(k == pl.num_programs(1) - 1)
    def _():
        h = acc_ref[...] + b_ref[...]          # (1, H) bias broadcast, once per row tile
        o_ref[...] = _leaky_relu(h)


# ----------------------------------------------------------------------------
# pallas_call wrappers (padded shapes only)
# ----------------------------------------------------------------------------
def _node_tile(n_pad):
    return TILE_NODES if (n_pad >= TILE_NODES and n_pad % TILE_NODES == 0) else n_pad


def _xw_matmul(h, w):
    n_pad, f_pad = h.shape
    h_out = w.shape[1]
    tk = _node_tile(n_pad)
    return pl.pallas_call(
        xw_kernel,
        out_shape=jax.ShapeDtypeStruct((n_pad, h_out), jnp.float32),
        grid=(n_pad // tk,),
        in_specs=[pl.BlockSpec((tk, f_pad), lambda k: (k, 0)),
                  pl.BlockSpec((f_pad, h_out), lambda k: (0, 0))],
        out_specs=pl.BlockSpec((tk, h_out), lambda k: (k, 0)),
        compiler_params=pltpu.CompilerParams(
            dimension_semantics=("parallel",),
            vmem_limit_bytes=VMEM_LIMIT),
    )(h, w)


def _aggregate(a_bf16, xw, b):
    n_pad = a_bf16.shape[0]
    h_out = xw.shape[1]
    t = _node_tile(n_pad)
    return pl.pallas_call(
        aggregate_kernel,
        out_shape=jax.ShapeDtypeStruct((n_pad, h_out), jnp.float32),
        grid=(n_pad // t, n_pad // t),
        in_specs=[pl.BlockSpec((t, t), lambda i, k: (i, k)),        # A_hat tile (bf16)
                  pl.BlockSpec((t, h_out), lambda i, k: (k, 0)),    # XW row tile
                  pl.BlockSpec((1, h_out), lambda i, k: (0, 0))],   # bias
        out_specs=pl.BlockSpec((t, h_out), lambda i, k: (i, 0)),
        scratch_shapes=[pltpu.VMEM((t, h_out), jnp.float32)],       # f32 accumulator
        compiler_params=pltpu.CompilerParams(
            dimension_semantics=("parallel", "arbitrary"),
            vmem_limit_bytes=VMEM_LIMIT),
    )(a_bf16, xw, b)


@jax.jit
def _forward_padded(a_bf16, x_pad, params_pad):
    h = x_pad
    for w, b in params_pad:
        h = _aggregate(a_bf16, _xw_matmul(h, w), b)
    return h


# ----------------------------------------------------------------------------
# Host-side glue: adjacency normalization, padding, public entry point
# ----------------------------------------------------------------------------
def build_normalized_adjacency(edge_index, num_nodes):
    """Dense A_hat = D^{-1/2}(A + I)D^{-1/2} matching PyG gcn_norm for
    unweighted graphs: duplicate edges scatter-add, exactly one self-loop of
    weight 1 per node (existing self-loops are not double counted)."""
    src, dst = edge_index[0], edge_index[1]
    a = jnp.zeros((num_nodes, num_nodes), jnp.float32).at[dst, src].add(1.0)
    eye = jnp.eye(num_nodes, dtype=jnp.float32)
    a = a * (1.0 - eye) + eye                   # exactly one self-loop per node
    deg = jnp.sum(a, axis=1)
    dinv = jnp.where(deg > 0, 1.0 / jnp.sqrt(deg), 0.0)
    return dinv[:, None] * a * dinv[None, :]


def _pad2(x, rows, cols):
    return jnp.pad(x, ((0, rows - x.shape[0]), (0, cols - x.shape[1])))


def backbone_forward(edge_index, x, params, hidden_dim):
    """params = ((W1, b1), (W2, b2), (W3, b3)); biases shaped (1, hidden_dim)."""
    n = x.shape[0]
    n_pad = _round_up(n, TILE_NODES) if n >= TILE_NODES else _round_up(n, 8)
    f_pad = _round_up(x.shape[1], LANE)
    h_pad = _round_up(hidden_dim, LANE)

    a = build_normalized_adjacency(edge_index, n)
    a_p = _pad2(a, n_pad, n_pad).astype(jnp.bfloat16)   # bf16 stream, f32 math in-kernel
    x_p = _pad2(x, n_pad, f_pad).astype(jnp.float32)

    params_p = []
    for w, b in params:
        w_p = _pad2(w, _round_up(w.shape[0], LANE), h_pad).astype(jnp.float32)
        b_p = _pad2(b, 1, h_pad).astype(jnp.float32)
        params_p.append((w_p, b_p))

    out_p = _forward_padded(a_p, x_p, tuple(params_p))
    return out_p[:n, :hidden_dim]


# ----------------------------------------------------------------------------
# Reference + demo
# ----------------------------------------------------------------------------
def init_params(key, input_dim, hidden_dim, n_layers=3):
    params = []
    dims_in = [input_dim] + [hidden_dim] * (n_layers - 1)
    for din in dims_in:
        key, sub = jax.random.split(key)
        scale = jnp.sqrt(2.0 / (din + hidden_dim))
        w = scale * jax.random.normal(sub, (din, hidden_dim), jnp.float32)
        b = jnp.zeros((1, hidden_dim), jnp.float32)
        params.append((w, b))
    return tuple(params)


def reference_forward(a_norm, x, params):
    """Pure-JAX f32 reference of the same math (HIGHEST precision matmuls)."""
    h = x
    hi = jax.lax.Precision.HIGHEST
    for w, b in params:
        xw = jnp.dot(h, w, precision=hi)
        h = _leaky_relu(jnp.dot(a_norm, xw, precision=hi) + b)
    return h


if __name__ == "__main__":
    key = jax.random.PRNGKey(0)

    n_nodes = 8
    input_dim = 16
    hidden_dim = 64   # module default

    # Deterministic small graph: ring over 8 nodes + two chords, undirected.
    edges = [(i, (i + 1) % n_nodes) for i in range(n_nodes)] + [(0, 4), (2, 6)]
    src = [s for (s, d) in edges] + [d for (s, d) in edges]
    dst = [d for (s, d) in edges] + [s for (s, d) in edges]
    edge_index = jnp.array([src, dst], dtype=jnp.int32)   # [2, 20]

    key, kx, kp = jax.random.split(key, 3)
    x = jax.random.normal(kx, (n_nodes, input_dim), jnp.float32)
    params = init_params(kp, input_dim, hidden_dim, n_layers=3)

    out = backbone_forward(edge_index, x, params, hidden_dim)
    out = jax.block_until_ready(out)
    assert out.shape == (n_nodes, hidden_dim)

    # Reference uses the same bf16-quantized A_hat (the only approximation the
    # kernel introduces), computed in full f32.
    a_f32 = build_normalized_adjacency(edge_index, n_nodes)
    a_q = a_f32.astype(jnp.bfloat16).astype(jnp.float32)
    ref = reference_forward(a_q, x, params)
    assert jnp.allclose(out, ref, atol=1e-2, rtol=1e-2), (
        float(jnp.max(jnp.abs(out - ref))))

    print("KERNEL_OK")
</pallas_src>

<mosaic_0001>
module attributes {stable_mosaic.version = 11 : i64} {
  func.func @xw_kernel(%arg0: i32, %arg1: memref<8x128xf32, #tpu.memory_space<vmem>>, %arg2: memref<128x128xf32, #tpu.memory_space<vmem>>, %arg3: memref<8x128xf32, #tpu.memory_space<vmem>>) attributes {dimension_semantics = [#tpu.dimension_semantics<parallel>], iteration_bounds = array<i64: 1>, scalar_prefetch = 0 : i64, scratch_operands = 0 : i64, tpu.core_type = #tpu.core_type<tc>, window_params = [{transform_indices = @transform_0, window_bounds = array<i64: 8, 128>}, {pipeline_mode = #tpu.pipeline_mode<synchronous>, transform_indices = @transform_1, window_bounds = array<i64: 128, 128>}, {transform_indices = @transform_2, window_bounds = array<i64: 8, 128>}]} {
    %c0 = arith.constant 0 : index
    %c0_0 = arith.constant 0 : index
    %0 = vector.load %arg1[%c0, %c0_0] : memref<8x128xf32, #tpu.memory_space<vmem>>, vector<8x128xf32>
    %c0_1 = arith.constant 0 : index
    %c0_2 = arith.constant 0 : index
    %1 = vector.load %arg2[%c0_1, %c0_2] : memref<128x128xf32, #tpu.memory_space<vmem>>, vector<128x128xf32>
    %cst = arith.constant dense<0.000000e+00> : vector<8x128xf32>
    %2 = tpu.matmul %0, %1, %cst {dimension_numbers = #tpu.dot_dimension_numbers<[1], [0], [0], [1], [0, 0, 1, 1], [], []>} : vector<8x128xf32>, vector<128x128xf32>, vector<8x128xf32> -> vector<8x128xf32>
    %c0_3 = arith.constant 0 : index
    %c0_4 = arith.constant 0 : index
    %3 = vector.load %arg3[%c0_3, %c0_4] : memref<8x128xf32, #tpu.memory_space<vmem>>, vector<8x128xf32>
    tpu.vector_store %arg3[%c0_3, %c0_4], %2 {strides = array<i32>} : memref<8x128xf32, #tpu.memory_space<vmem>>, vector<8x128xf32>,
    return
  }
  func.func @transform_0(%arg0: i32) -> (i32, i32) {
    %c0_i32 = arith.constant 0 : i32
    %c0_i32_0 = arith.constant 0 : i32
    return %arg0, %c0_i32 : i32, i32
  }
  func.func @transform_1(%arg0: i32) -> (i32, i32) {
    %c0_i32 = arith.constant 0 : i32
    %c0_i32_0 = arith.constant 0 : i32
    %c0_i32_1 = arith.constant 0 : i32
    return %c0_i32, %c0_i32_0 : i32, i32
  }
  func.func @transform_2(%arg0: i32) -> (i32, i32) {
    %c0_i32 = arith.constant 0 : i32
    %c0_i32_0 = arith.constant 0 : i32
    return %arg0, %c0_i32 : i32, i32
  }
}

module attributes {stable_mosaic.version = 11 : i64} {
  func.func @xw_kernel(%arg0: i32, %arg1: memref<8x128xf32, #tpu.memory_space<vmem>>, %arg2: memref<128x128xf32, #tpu.memory_space<vmem>>, %arg3: memref<8x128xf32, #tpu.memory_space<vmem>>) attributes {dimension_semantics = [#tpu.dimension_semantics<parallel>], iteration_bounds = array<i64: 1>, scalar_prefetch = 0 : i64, scratch_operands = 0 : i64, tpu.core_type = #tpu.core_type<tc>, window_params = [{transform_indices = @transform_0, window_bounds = array<i64: 8, 128>}, {pipeline_mode = #tpu.pipeline_mode<synchronous>, transform_indices = @transform_1, window_bounds = array<i64: 128, 128>}, {transform_indices = @transform_2, window_bounds = array<i64: 8, 128>}]} {
    %c0 = arith.constant 0 : index
    %c0_0 = arith.constant 0 : index
    %0 = vector.load %arg1[%c0, %c0_0] : memref<8x128xf32, #tpu.memory_space<vmem>>, vector<8x128xf32>
    %c0_1 = arith.constant 0 : index
    %c0_2 = arith.constant 0 : index
    %1 = vector.load %arg2[%c0_1, %c0_2] : memref<128x128xf32, #tpu.memory_space<vmem>>, vector<128x128xf32>
    %cst = arith.constant dense<0.000000e+00> : vector<8x128xf32>
    %2 = tpu.matmul %0, %1, %cst {dimension_numbers = #tpu.dot_dimension_numbers<[1], [0], [0], [1], [0, 0, 1, 1], [], []>} : vector<8x128xf32>, vector<128x128xf32>, vector<8x128xf32> -> vector<8x128xf32>
    %c0_3 = arith.constant 0 : index
    %c0_4 = arith.constant 0 : index
    %3 = vector.load %arg3[%c0_3, %c0_4] : memref<8x128xf32, #tpu.memory_space<vmem>>, vector<8x128xf32>
    tpu.vector_store %arg3[%c0_3, %c0_4], %2 {strides = array<i32>} : memref<8x128xf32, #tpu.memory_space<vmem>>, vector<8x128xf32>,
    return
  }
  func.func @transform_0(%arg0: i32) -> (i32, i32) {
    %c0_i32 = arith.constant 0 : i32
    %c0_i32_0 = arith.constant 0 : i32
    return %arg0, %c0_i32 : i32, i32
  }
  func.func @transform_1(%arg0: i32) -> (i32, i32) {
    %c0_i32 = arith.constant 0 : i32
    %c0_i32_0 = arith.constant 0 : i32
    %c0_i32_1 = arith.constant 0 : i32
    return %c0_i32, %c0_i32_0 : i32, i32
  }
  func.func @transform_2(%arg0: i32) -> (i32, i32) {
    %c0_i32 = arith.constant 0 : i32
    %c0_i32_0 = arith.constant 0 : i32
    return %arg0, %c0_i32 : i32, i32
  }
}

module attributes {stable_mosaic.version = 11 : i64} {
  func.func @aggregate_kernel(%arg0: i32, %arg1: i32, %arg2: memref<8x8xbf16, #tpu.memory_space<vmem>>, %arg3: memref<8x128xf32, #tpu.memory_space<vmem>>, %arg4: memref<1x128xf32, #tpu.memory_space<vmem>>, %arg5: memref<8x128xf32, #tpu.memory_space<vmem>>, %arg6: memref<8x128xf32, #tpu.memory_space<vmem>>) attributes {dimension_semantics = [#tpu.dimension_semantics<parallel>, #tpu.dimension_semantics<arbitrary>], iteration_bounds = array<i64: 1, 1>, scalar_prefetch = 0 : i64, scratch_operands = 1 : i64, tpu.core_type = #tpu.core_type<tc>, window_params = [{transform_indices = @transform_0, window_bounds = array<i64: 8, 8>}, {transform_indices = @transform_1, window_bounds = array<i64: 8, 128>}, {pipeline_mode = #tpu.pipeline_mode<synchronous>, transform_indices = @transform_2, window_bounds = array<i64: 1, 128>}, {transform_indices = @transform_3, window_bounds = array<i64: 8, 128>}]} {
    %c0_i32 = arith.constant 0 : i32
    %0 = arith.cmpi eq, %arg1, %c0_i32 : i32
    %1 = arith.extui %0 : i1 to i32
    %c0_i32_0 = arith.constant 0 : i32
    %2 = arith.cmpi ne, %1, %c0_i32_0 : i32
    scf.if %2 {
      %cst_10 = arith.constant 0.000000e+00 : f32
      %13 = vector.broadcast %cst_10 : f32 to vector<8x128xf32>
      %c0_11 = arith.constant 0 : index
      %c0_12 = arith.constant 0 : index
      %14 = vector.load %arg6[%c0_11, %c0_12] : memref<8x128xf32, #tpu.memory_space<vmem>>, vector<8x128xf32>
      tpu.vector_store %arg6[%c0_11, %c0_12], %13 {strides = array<i32>} : memref<8x128xf32, #tpu.memory_space<vmem>>, vector<8x128xf32>,
    } else {
    }
    %c0 = arith.constant 0 : index
    %c0_1 = arith.constant 0 : index
    %3 = vector.load %arg2[%c0, %c0_1] : memref<8x8xbf16, #tpu.memory_space<vmem>>, vector<8x8xbf16>
    %4 = arith.extf %3 : vector<8x8xbf16> to vector<8x8xf32>
    %c0_2 = arith.constant 0 : index
    %c0_3 = arith.constant 0 : index
    %5 = vector.load %arg6[%c0_2, %c0_3] : memref<8x128xf32, #tpu.memory_space<vmem>>, vector<8x128xf32>
    %c0_4 = arith.constant 0 : index
    %c0_5 = arith.constant 0 : index
    %6 = vector.load %arg3[%c0_4, %c0_5] : memref<8x128xf32, #tpu.memory_space<vmem>>, vector<8x128xf32>
    %cst = arith.constant dense<0.000000e+00> : vector<8x128xf32>
    %7 = tpu.matmul %4, %6, %cst {dimension_numbers = #tpu.dot_dimension_numbers<[1], [0], [0], [1], [0, 0, 1, 1], [], []>} : vector<8x8xf32>, vector<8x128xf32>, vector<8x128xf32> -> vector<8x128xf32>
    %8 = arith.addf %5, %7 : vector<8x128xf32>
    %c0_6 = arith.constant 0 : index
    %c0_7 = arith.constant 0 : index
    %9 = vector.load %arg6[%c0_6, %c0_7] : memref<8x128xf32, #tpu.memory_space<vmem>>, vector<8x128xf32>
    tpu.vector_store %arg6[%c0_6, %c0_7], %8 {strides = array<i32>} : memref<8x128xf32, #tpu.memory_space<vmem>>, vector<8x128xf32>,
    %c0_i32_8 = arith.constant 0 : i32
    %10 = arith.cmpi eq, %arg1, %c0_i32_8 : i32
    %11 = arith.extui %10 : i1 to i32
    %c0_i32_9 = arith.constant 0 : i32
    %12 = arith.cmpi ne, %11, %c0_i32_9 : i32
    scf.if %12 {
      %c0_10 = arith.constant 0 : index
      %c0_11 = arith.constant 0 : index
      %13 = vector.load %arg6[%c0_10, %c0_11] : memref<8x128xf32, #tpu.memory_space<vmem>>, vector<8x128xf32>
      %c0_12 = arith.constant 0 : index
      %c0_13 = arith.constant 0 : index
      %14 = vector.load %arg4[%c0_12, %c0_13] : memref<1x128xf32, #tpu.memory_space<vmem>>, vector<1x128xf32>
      %15 = vector.broadcast %14 : vector<1x128xf32> to vector<8x128xf32>
      %16 = arith.addf %13, %15 : vector<8x128xf32>
      %cst_14 = arith.constant 0.000000e+00 : f32
      %17 = vector.broadcast %cst_14 : f32 to vector<8x128xf32>
      %18 = arith.cmpf ogt, %16, %17 : vector<8x128xf32>
      %cst_15 = arith.constant 0.00999999977 : f32
      %19 = vector.broadcast %cst_15 : f32 to vector<8x128xf32>
      %20 = arith.mulf %19, %16 : vector<8x128xf32>
      %21 = arith.select %18, %16, %20 : vector<8x128xi1>, vector<8x128xf32>
      %c0_16 = arith.constant 0 : index
      %c0_17 = arith.constant 0 : index
      %22 = vector.load %arg5[%c0_16, %c0_17] : memref<8x128xf32, #tpu.memory_space<vmem>>, vector<8x128xf32>
      tpu.vector_store %arg5[%c0_16, %c0_17], %21 {strides = array<i32>} : memref<8x128xf32, #tpu.memory_space<vmem>>, vector<8x128xf32>,
    } else {
    }
    return
  }
  func.func @transform_0(%arg0: i32, %arg1: i32) -> (i32, i32) {
    %c0_i32 = arith.constant 0 : i32
    return %arg0, %arg1 : i32, i32
  }
  func.func @transform_1(%arg0: i32, %arg1: i32) -> (i32, i32) {
    %c0_i32 = arith.constant 0 : i32
    %c0_i32_0 = arith.constant 0 : i32
    return %arg1, %c0_i32 : i32, i32
  }
  func.func @transform_2(%arg0: i32, %arg1: i32) -> (i32, i32) {
    %c0_i32 = arith.constant 0 : i32
    %c0_i32_0 = arith.constant 0 : i32
    %c0_i32_1 = arith.constant 0 : i32
    return %c0_i32, %c0_i32_0 : i32, i32
  }
  func.func @transform_3(%arg0: i32, %arg1: i32) -> (i32, i32) {
    %c0_i32 = arith.constant 0 : i32
    %c0_i32_0 = arith.constant 0 : i32
    return %arg0, %c0_i32 : i32, i32
  }
}

module attributes {stable_mosaic.version = 11 : i64} {
  func.func @aggregate_kernel(%arg0: i32, %arg1: i32, %arg2: memref<8x8xbf16, #tpu.memory_space<vmem>>, %arg3: memref<8x128xf32, #tpu.memory_space<vmem>>, %arg4: memref<1x128xf32, #tpu.memory_space<vmem>>, %arg5: memref<8x128xf32, #tpu.memory_space<vmem>>, %arg6: memref<8x128xf32, #tpu.memory_space<vmem>>) attributes {dimension_semantics = [#tpu.dimension_semantics<parallel>, #tpu.dimension_semantics<arbitrary>], iteration_bounds = array<i64: 1, 1>, scalar_prefetch = 0 : i64, scratch_operands = 1 : i64, tpu.core_type = #tpu.core_type<tc>, window_params = [{transform_indices = @transform_0, window_bounds = array<i64: 8, 8>}, {transform_indices = @transform_1, window_bounds = array<i64: 8, 128>}, {pipeline_mode = #tpu.pipeline_mode<synchronous>, transform_indices = @transform_2, window_bounds = array<i64: 1, 128>}, {transform_indices = @transform_3, window_bounds = array<i64: 8, 128>}]} {
    %c0_i32 = arith.constant 0 : i32
    %0 = arith.cmpi eq, %arg1, %c0_i32 : i32
    %1 = arith.extui %0 : i1 to i32
    %c0_i32_0 = arith.constant 0 : i32
    %2 = arith.cmpi ne, %1, %c0_i32_0 : i32
    scf.if %2 {
      %cst_10 = arith.constant 0.000000e+00 : f32
      %13 = vector.broadcast %cst_10 : f32 to vector<8x128xf32>
      %c0_11 = arith.constant 0 : index
      %c0_12 = arith.constant 0 : index
      %14 = vector.load %arg6[%c0_11, %c0_12] : memref<8x128xf32, #tpu.memory_space<vmem>>, vector<8x128xf32>
      tpu.vector_store %arg6[%c0_11, %c0_12], %13 {strides = array<i32>} : memref<8x128xf32, #tpu.memory_space<vmem>>, vector<8x128xf32>,
    } else {
    }
    %c0 = arith.constant 0 : index
    %c0_1 = arith.constant 0 : index
    %3 = vector.load %arg2[%c0, %c0_1] : memref<8x8xbf16, #tpu.memory_space<vmem>>, vector<8x8xbf16>
    %4 = arith.extf %3 : vector<8x8xbf16> to vector<8x8xf32>
    %c0_2 = arith.constant 0 : index
    %c0_3 = arith.constant 0 : index
    %5 = vector.load %arg6[%c0_2, %c0_3] : memref<8x128xf32, #tpu.memory_space<vmem>>, vector<8x128xf32>
    %c0_4 = arith.constant 0 : index
    %c0_5 = arith.constant 0 : index
    %6 = vector.load %arg3[%c0_4, %c0_5] : memref<8x128xf32, #tpu.memory_space<vmem>>, vector<8x128xf32>
    %cst = arith.constant dense<0.000000e+00> : vector<8x128xf32>
    %7 = tpu.matmul %4, %6, %cst {dimension_numbers = #tpu.dot_dimension_numbers<[1], [0], [0], [1], [0, 0, 1, 1], [], []>} : vector<8x8xf32>, vector<8x128xf32>, vector<8x128xf32> -> vector<8x128xf32>
    %8 = arith.addf %5, %7 : vector<8x128xf32>
    %c0_6 = arith.constant 0 : index
    %c0_7 = arith.constant 0 : index
    %9 = vector.load %arg6[%c0_6, %c0_7] : memref<8x128xf32, #tpu.memory_space<vmem>>, vector<8x128xf32>
    tpu.vector_store %arg6[%c0_6, %c0_7], %8 {strides = array<i32>} : memref<8x128xf32, #tpu.memory_space<vmem>>, vector<8x128xf32>,
    %c0_i32_8 = arith.constant 0 : i32
    %10 = arith.cmpi eq, %arg1, %c0_i32_8 : i32
    %11 = arith.extui %10 : i1 to i32
    %c0_i32_9 = arith.constant 0 : i32
    %12 = arith.cmpi ne, %11, %c0_i32_9 : i32
    scf.if %12 {
      %c0_10 = arith.constant 0 : index
      %c0_11 = arith.constant 0 : index
      %13 = vector.load %arg6[%c0_10, %c0_11] : memref<8x128xf32, #tpu.memory_space<vmem>>, vector<8x128xf32>
      %c0_12 = arith.constant 0 : index
      %c0_13 = arith.constant 0 : index
      %14 = vector.load %arg4[%c0_12, %c0_13] : memref<1x128xf32, #tpu.memory_space<vmem>>, vector<1x128xf32>
      %15 = vector.broadcast %14 : vector<1x128xf32> to vector<8x128xf32>
      %16 = arith.addf %13, %15 : vector<8x128xf32>
      %cst_14 = arith.constant 0.000000e+00 : f32
      %17 = vector.broadcast %cst_14 : f32 to vector<8x128xf32>
      %18 = arith.cmpf ogt, %16, %17 : vector<8x128xf32>
      %cst_15 = arith.constant 0.00999999977 : f32
      %19 = vector.broadcast %cst_15 : f32 to vector<8x128xf32>
      %20 = arith.mulf %19, %16 : vector<8x128xf32>
      %21 = arith.select %18, %16, %20 : vector<8x128xi1>, vector<8x128xf32>
      %c0_16 = arith.constant 0 : index
      %c0_17 = arith.constant 0 : index
      %22 = vector.load %arg5[%c0_16, %c0_17] : memref<8x128xf32, #tpu.memory_space<vmem>>, vector<8x128xf32>
      tpu.vector_store %arg5[%c0_16, %c0_17], %21 {strides = array<i32>} : memref<8x128xf32, #tpu.memory_space<vmem>>, vector<8x128xf32>,
    } else {
    }
    return
  }
  func.func @transform_0(%arg0: i32, %arg1: i32) -> (i32, i32) {
    %c0_i32 = arith.constant 0 : i32
    return %arg0, %arg1 : i32, i32
  }
  func.func @transform_1(%arg0: i32, %arg1: i32) -> (i32, i32) {
    %c0_i32 = arith.constant 0 : i32
    %c0_i32_0 = arith.constant 0 : i32
    return %arg1, %c0_i32 : i32, i32
  }
  func.func @transform_2(%arg0: i32, %arg1: i32) -> (i32, i32) {
    %c0_i32 = arith.constant 0 : i32
    %c0_i32_0 = arith.constant 0 : i32
    %c0_i32_1 = arith.constant 0 : i32
    return %c0_i32, %c0_i32_0 : i32, i32
  }
  func.func @transform_3(%arg0: i32, %arg1: i32) -> (i32, i32) {
    %c0_i32 = arith.constant 0 : i32
    %c0_i32_0 = arith.constant 0 : i32
    return %arg0, %c0_i32 : i32, i32
  }
}

</mosaic_0001>

<llo_original>
// kernel: _forward_padded.7
$region0: #{_forward_padded.7}
  #allocation0 [shape = 'u32[]', space=smem, size = 0x4, offset = 0x4, fixed_abs, tag = 'smem constant byte address 0x4 - core index']
  #allocation1 [shape = 'u32[144,128]{1,0:T(1,128)}', space=vmem, size = 0x12000, scoped, tag = 'internal scratch']
  #allocation2 [shape = 'f32[8,128]{1,0:T(8,128)}', space=vmem, size = 0x1000, scoped, tag = 'scratch operand']
  %s0 = inlined_call_operand.vmem [shape: bf16[8,8], index: 0, kind: input, shape index: {}]
  %s1 = inlined_call_operand.vmem [shape: f32[8,128], index: 1, kind: input, shape index: {}]
  %s2 = inlined_call_operand.vmem [shape: f32[1,128], index: 2, kind: input, shape index: {}]
  %s3 = inlined_call_operand.vmem [shape: f32[8,128], index: 3, kind: output, shape index: {}]
  %s4 = sld [smem:[#allocation0]]
  $region30: #{_forward_padded.7} parent=0
    _
  %s6 = ssub.s32 1, %s4
  %s7 = scalar_select 0, %s6, %s4
  // Predicated region
  $region2: #{_forward_padded.7} parent=0 // pred_check
    _
  $region3: #{_forward_padded.7} parent=0 // pred_check_branch
    %9 = sbr.rel (0) target = $region5
  $region4: #{_forward_padded.7} parent=0 // pred_region
    _
  $region5: #{_forward_padded.7} parent=0 // pred_fallthru
    _
  // Predicated region
  $region6: #{_forward_padded.7} parent=0 // pred_check
    _
  $region7: #{_forward_padded.7} parent=0 // pred_check_branch
    %11 = sbr.rel (0) target = $region9
  $region8: #{_forward_padded.7} parent=0 // pred_region
    _
  $region9: #{_forward_padded.7} parent=0 // pred_fallthru
    _
  // Predicated region
  $region10: #{_forward_padded.7} parent=0 // pred_check
    _
  $region11: #{_forward_padded.7} parent=0 // pred_check_branch
    %13 = sbr.rel (0) target = $region13
  $region12: #{_forward_padded.7} parent=0 // pred_region
    _
  $region13: #{_forward_padded.7} parent=0 // pred_fallthru
    _
  %p14 = scmp.eq.s32.totalorder 0, 0
  // Predicated region
  $region14: #{_forward_padded.7} parent=0 // pred_check
    %p15 = pneg %p14
  $region15: #{_forward_padded.7} parent=0 // pred_check_branch
    %17 = sbr.rel (%p15) target = $region17
  $region16: #{_forward_padded.7} parent=0 // pred_region
    %18 = vst [vmem:[#allocation2] sm:$0xff] 0.0
  $region17: #{_forward_padded.7} parent=0 // pred_fallthru
    _
  %v19 = vld [vmem:[%s0] sm:$0xf]
  %v20 = vunpack.c.l.bf16 %v19
  %v21 = vld [vmem:[#allocation2] sm:$0xff]
  %v22 = vld [vmem:[%s1] sm:$0xff]
  %vm23 = vcmask 64512
  %v25 = vsel %vm23, %v20, 0
  %27 = vmatprep.subr.mxu0 0.0
  %28 = vmatpush1.msra.mxu0 %v22
  %29 = vmatprep.subr.mxu0 0.0
  %30 = vmatpush1.msra.mxu0 0.0
  %31 = vmatprep.subr.mxu0 0.0
  %32 = vmatpush1.msra.mxu0 0.0
  %33 = vmatprep.subr.mxu0 0.0
  %34 = vmatpush1.msra.mxu0 0.0
  %35 = vmatprep.subr.mxu0 0.0
  %36 = vmatpush1.msra.mxu0 0.0
  %37 = vmatprep.subr.mxu0 0.0
  %38 = vmatpush1.msra.mxu0 0.0
  %39 = vmatprep.subr.mxu0 0.0
  %40 = vmatpush1.msra.mxu0 0.0
  %41 = vmatprep.subr.mxu0 0.0
  %42 = vmatpush1.msra.mxu0 0.0
  %43 = vmatprep.subr.mxu0 0.0
  %44 = vmatpush1.msra.mxu0 0.0
  %45 = vmatprep.subr.mxu0 0.0
  %46 = vmatpush1.msra.mxu0 0.0
  %47 = vmatprep.subr.mxu0 0.0
  %48 = vmatpush1.msra.mxu0 0.0
  %49 = vmatprep.subr.mxu0 0.0
  %50 = vmatpush1.msra.mxu0 0.0
  %51 = vmatprep.subr.mxu0 0.0
  %52 = vmatpush1.msra.mxu0 0.0
  %53 = vmatprep.subr.mxu0 0.0
  %54 = vmatpush1.msra.mxu0 0.0
  %55 = vmatprep.subr.mxu0 0.0
  %56 = vmatpush1.msra.mxu0 0.0
  %57 = vmatprep.subr.mxu0 0.0
  %58 = vmatpush1.msra.mxu0 0.0
  %59 = vmatprep.subr.mxu0 0.0
  %60 = vmatpush1.msra.mxu0 0.0
  %61 = vmatprep.subr.mxu0 0.0
  %62 = vmatpush1.msra.mxu0 0.0
  %63 = vmatprep.subr.mxu0 0.0
  %64 = vmatpush1.msra.mxu0 0.0
  %65 = vmatprep.subr.mxu0 0.0
  %66 = vmatpush1.msra.mxu0 0.0
  %67 = vmatprep.subr.mxu0 0.0
  %68 = vmatpush1.msra.mxu0 0.0
  %69 = vmatprep.subr.mxu0 0.0
  %70 = vmatpush1.msra.mxu0 0.0
  %71 = vmatprep.subr.mxu0 0.0
  %72 = vmatpush1.msra.mxu0 0.0
  %73 = vmatprep.subr.mxu0 0.0
  %74 = vmatpush1.msra.mxu0 0.0
  %75 = vmatprep.subr.mxu0 0.0
  %76 = vmatpush1.msra.mxu0 0.0
  %77 = vmatprep.subr.mxu0 0.0
  %78 = vmatpush1.msra.mxu0 0.0
  %79 = vmatprep.subr.mxu0 0.0
  %80 = vmatpush1.msra.mxu0 0.0
  %81 = vmatprep.subr.mxu0 0.0
  %82 = vmatpush1.msra.mxu0 0.0
  %83 = vmatprep.subr.mxu0 0.0
  %84 = vmatpush1.msra.mxu0 0.0
  %85 = vmatprep.subr.mxu0 0.0
  %86 = vmatpush1.msra.mxu0 0.0
  %87 = vmatprep.subr.mxu0 0.0
  %88 = vmatpush1.msra.mxu0 0.0
  %89 = vmatprep.subr.mxu0 0.0
  %90 = vmatpush1.msra.mxu0 0.0
  %91 = vmatprep.mubr.f32.mxu0 0.0
  %92 = vmatmul.mubr.f32.gmra.mrb[0].mxu0 %v25
  %v93 = vpop.f32.mrb[0].mxu0
  %v94 = vadd.f32 0.0, %v93
  %v95 = vpop.f32.mrb[0].mxu0
  %96 = vdwg.mxu0
  %v97 = vadd.f32 %v21, %v94
  %98 = vst [vmem:[#allocation2] sm:$0xff] %v97
  // Predicated region
  $region18: #{_forward_padded.7} parent=0 // pred_check
    %p99 = pneg %p14
  $region19: #{_forward_padded.7} parent=0 // pred_check_branch
    %101 = sbr.rel (%p99) target = $region21
  $region20: #{_forward_padded.7} parent=0 // pred_region
    %v102 = vld [vmem:[#allocation2] sm:$0xff]
    %v103 = vld [vmem:[%s2] sm:$0x1]
    %v105 = vlaneseq
    %v106 = vshrl.u32 %v105, 7
    %v107 = vsub.s32 0, %v106
    %v108 = vrot.slane %v103, %v107
    %v110 = vadd.f32 %v102, %v108
    %vm111 = vcmp.gt.f32.partialorder %v110, 0.0
    %v112 = vmul.f32 %v110, 0.01
    %v113 = vsel %vm111, %v110, %v112
    %114 = vst [vmem:[%s3] sm:$0xff] %v113
  $region21: #{_forward_padded.7} parent=0 // pred_fallthru
    _
  // Predicated region
  $region22: #{_forward_padded.7} parent=0 // pred_check
    _
  $region23: #{_forward_padded.7} parent=0 // pred_check_branch
    %116 = sbr.rel (0) target = $region25
  $region24: #{_forward_padded.7} parent=0 // pred_region
    _
  $region25: #{_forward_padded.7} parent=0 // pred_fallthru
    _
  // Predicated region
  $region26: #{_forward_padded.7} parent=0 // pred_check
    _
  $region27: #{_forward_padded.7} parent=0 // pred_check_branch
    %118 = sbr.rel (0) target = $region29
  $region28: #{_forward_padded.7} parent=0 // pred_region
    _
  $region29: #{_forward_padded.7} parent=0 // pred_fallthru
    _

// kernel: _forward_padded.6
$region0: #{_forward_padded.6}
  #allocation0 [shape = 'u32[]', space=smem, size = 0x4, offset = 0x4, fixed_abs, tag = 'smem constant byte address 0x4 - core index']
  #allocation1 [shape = 'u32[144,128]{1,0:T(1,128)}', space=vmem, size = 0x12000, scoped, tag = 'internal scratch']
  %s0 = inlined_call_operand.hbm [shape: f32[8,128], index: 0, kind: input, shape index: {}]
  %s1 = inlined_call_operand.hbm [shape: f32[128,128], index: 1, kind: input, shape index: {}]
  %s2 = inlined_call_operand.vmem [shape: f32[8,128], index: 2, kind: output, shape index: {}]
  %s3 = sld [smem:[#allocation0]]
  $region26: #{_forward_padded.6} parent=0
    _
  %s5 = ssub.s32 1, %s3
  %s6 = scalar_select 0, %s5, %s3
  $region1: #{_forward_padded.6} parent=0
    #allocation2 [shape = 'u8[4096]{0}', space=vmem, size = 0x1000, scoped, tag = 'input window, operand 0, single buffered']
    #allocation3 [shape = 's32[1]{0}', space=sflag, size = 0x4, scoped, tag = 'scoped memory for _forward_padded.6']
    #allocation4 [shape = 'u8[65536]{0}', space=vmem, size = 0x10000, scoped, tag = 'input window, operand 1, single buffered']
    #allocation5 [shape = 's32[1]{0}', space=sflag, size = 0x4, scoped, tag = 'scoped memory for _forward_padded.6']
    %7 = vsyncpa [#allocation3], 0
    %8 = vsyncpa [#allocation5], 0
    // Predicated region
    $region2: #{_forward_padded.6} parent=1 // pred_check
      _
    $region3: #{_forward_padded.6} parent=1 // pred_check_branch
      %10 = sbr.rel (0) target = $region5
    $region4: #{_forward_padded.6} parent=1 // pred_region
      %s12 = ssub.s32 128, 128
      %13 = vsyncadd [#allocation3], %s12
      %s15 = sshll.u32 [#allocation2], 4
      %s16 = int_to_ptr.vmem [resolvable:$true] %s15
      %18 = dma.hbm_to_vmem [thread:$0]  %s0, 128, %s16, [#allocation3]
    $region5: #{_forward_padded.6} parent=1 // pred_fallthru
      _
    // Predicated region
    $region6: #{_forward_padded.6} parent=1 // pred_check
      _
    $region7: #{_forward_padded.6} parent=1 // pred_check_branch
      %20 = sbr.rel (0) target = $region9
    $region8: #{_forward_padded.6} parent=1 // pred_region
      %s22 = ssub.s32 2048, 2048
      %23 = vsyncadd [#allocation5], %s22
      %s24 = sshll.u32 [#allocation4], 4
      %s25 = int_to_ptr.vmem [resolvable:$true] %s24
      %30 = dma.hbm_to_vmem [thread:$0]  %s1, 2048, %s25, [#allocation5], 128, 128, 8
    $region9: #{_forward_padded.6} parent=1 // pred_fallthru
      _
    // Predicated region
    $region10: #{_forward_padded.6} parent=1 // pred_check
      _
    $region11: #{_forward_padded.6} parent=1 // pred_check_branch
      %32 = sbr.rel (0) target = $region13
    $region12: #{_forward_padded.6} parent=1 // pred_region
      %33 = dma.done [#allocation3], 128
    $region13: #{_forward_padded.6} parent=1 // pred_fallthru
      _
    // Predicated region
    $region14: #{_forward_padded.6} parent=1 // pred_check
      _
    $region15: #{_forward_padded.6} parent=1 // pred_check_branch
      %35 = sbr.rel (0) target = $region17
    $region16: #{_forward_padded.6} parent=1 // pred_region
      %36 = dma.done [#allocation5], 2048
    $region17: #{_forward_padded.6} parent=1 // pred_fallthru
      _
    %v37 = vld [vmem:[#allocation2] sm:$0xff]
    %v38 = vld [vmem:[#allocation4] sm:$0xff]
    %v39 = vld [vmem:[#allocation4 + $0x8] sm:$0xff]
    %v40 = vld [vmem:[#allocation4 + $0x10] sm:$0xff]
    %v41 = vld [vmem:[#allocation4 + $0x18] sm:$0xff]
    %v42 = vld [vmem:[#allocation4 + $0x20] sm:$0xff]
    %v43 = vld [vmem:[#allocation4 + $0x28] sm:$0xff]
    %v44 = vld [vmem:[#allocation4 + $0x30] sm:$0xff]
    %v45 = vld [vmem:[#allocation4 + $0x38] sm:$0xff]
    %v46 = vld [vmem:[#allocation4 + $0x40] sm:$0xff]
    %v47 = vld [vmem:[#allocation4 + $0x48] sm:$0xff]
    %v48 = vld [vmem:[#allocation4 + $0x50] sm:$0xff]
    %v49 = vld [vmem:[#allocation4 + $0x58] sm:$0xff]
    %v50 = vld [vmem:[#allocation4 + $0x60] sm:$0xff]
    %v51 = vld [vmem:[#allocation4 + $0x68] sm:$0xff]
    %v52 = vld [vmem:[#allocation4 + $0x70] sm:$0xff]
    %v53 = vld [vmem:[#allocation4 + $0x78] sm:$0xff]
    %54 = vmatprep.subr.mxu0 0.0
    %55 = vmatpush1.msra.mxu0 %v38
    %56 = vmatprep.subr.mxu0 0.0
    %57 = vmatpush1.msra.mxu0 %v39
    %58 = vmatprep.subr.mxu0 0.0
    %59 = vmatpush1.msra.mxu0 %v40
    %60 = vmatprep.subr.mxu0 0.0
    %61 = vmatpush1.msra.mxu0 %v41
    %62 = vmatprep.subr.mxu0 0.0
    %63 = vmatpush1.msra.mxu0 %v42
    %64 = vmatprep.subr.mxu0 0.0
    %65 = vmatpush1.msra.mxu0 %v43
    %66 = vmatprep.subr.mxu0 0.0
    %67 = vmatpush1.msra.mxu0 %v44
    %68 = vmatprep.subr.mxu0 0.0
    %69 = vmatpush1.msra.mxu0 %v45
    %70 = vmatprep.subr.mxu0 0.0
    %71 = vmatpush1.msra.mxu0 %v46
    %72 = vmatprep.subr.mxu0 0.0
    %73 = vmatpush1.msra.mxu0 %v47
    %74 = vmatprep.subr.mxu0 0.0
    %75 = vmatpush1.msra.mxu0 %v48
    %76 = vmatprep.subr.mxu0 0.0
    %77 = vmatpush1.msra.mxu0 %v49
    %78 = vmatprep.subr.mxu0 0.0
    %79 = vmatpush1.msra.mxu0 %v50
    %80 = vmatprep.subr.mxu0 0.0
    %81 = vmatpush1.msra.mxu0 %v51
    %82 = vmatprep.subr.mxu0 0.0
    %83 = vmatpush1.msra.mxu0 %v52
    %84 = vmatprep.subr.mxu0 0.0
    %85 = vmatpush1.msra.mxu0 %v53
    %86 = vmatprep.subr.mxu0 0.0
    %87 = vmatpush1.msra.mxu0 0.0
    %88 = vmatprep.subr.mxu0 0.0
    %89 = vmatpush1.msra.mxu0 0.0
    %90 = vmatprep.subr.mxu0 0.0
    %91 = vmatpush1.msra.mxu0 0.0
    %92 = vmatprep.subr.mxu0 0.0
    %93 = vmatpush1.msra.mxu0 0.0
    %94 = vmatprep.subr.mxu0 0.0
    %95 = vmatpush1.msra.mxu0 0.0
    %96 = vmatprep.subr.mxu0 0.0
    %97 = vmatpush1.msra.mxu0 0.0
    %98 = vmatprep.subr.mxu0 0.0
    %99 = vmatpush1.msra.mxu0 0.0
    %100 = vmatprep.subr.mxu0 0.0
    %101 = vmatpush1.msra.mxu0 0.0
    %102 = vmatprep.subr.mxu0 0.0
    %103 = vmatpush1.msra.mxu0 0.0
    %104 = vmatprep.subr.mxu0 0.0
    %105 = vmatpush1.msra.mxu0 0.0
    %106 = vmatprep.subr.mxu0 0.0
    %107 = vmatpush1.msra.mxu0 0.0
    %108 = vmatprep.subr.mxu0 0.0
    %109 = vmatpush1.msra.mxu0 0.0
    %110 = vmatprep.subr.mxu0 0.0
    %111 = vmatpush1.msra.mxu0 0.0
    %112 = vmatprep.subr.mxu0 0.0
    %113 = vmatpush1.msra.mxu0 0.0
    %114 = vmatprep.subr.mxu0 0.0
    %115 = vmatpush1.msra.mxu0 0.0
    %116 = vmatprep.subr.mxu0 0.0
    %117 = vmatpush1.msra.mxu0 0.0
    %118 = vmatprep.mubr.f32.mxu0 0.0
    %119 = vmatmul.mubr.f32.gmra.mrb[0].mxu0 %v37
    %v120 = vpop.f32.mrb[0].mxu0
    %v121 = vadd.f32 0.0, %v120
    %v122 = vpop.f32.mrb[0].mxu0
    %123 = vdwg.mxu0
    %124 = vst [vmem:[%s2] sm:$0xff] %v121
    // Predicated region
    $region18: #{_forward_padded.6} parent=1 // pred_check
      _
    $region19: #{_forward_padded.6} parent=1 // pred_check_branch
      %126 = sbr.rel (0) target = $region21
    $region20: #{_forward_padded.6} parent=1 // pred_region
      _
    $region21: #{_forward_padded.6} parent=1 // pred_fallthru
      _
    // Predicated region
    $region22: #{_forward_padded.6} parent=1 // pred_check
      _
    $region23: #{_forward_padded.6} parent=1 // pred_check_branch
      %128 = sbr.rel (0) target = $region25
    $region24: #{_forward_padded.6} parent=1 // pred_region
      _
    $region25: #{_forward_padded.6} parent=1 // pred_fallthru
      _
    %129 = vsyncpa [#allocation3], 1
    %130 = vsyncpa [#allocation5], 1

// kernel: _forward_padded.11
$region0: #{_forward_padded.11}
  #allocation0 [shape = 'u32[]', space=smem, size = 0x4, offset = 0x4, fixed_abs, tag = 'smem constant byte address 0x4 - core index']
  #allocation1 [shape = 'u32[144,128]{1,0:T(1,128)}', space=vmem, size = 0x12000, scoped, tag = 'internal scratch']
  #allocation2 [shape = 'f32[8,128]{1,0:T(8,128)}', space=vmem, size = 0x1000, scoped, tag = 'scratch operand']
  %s0 = inlined_call_operand.vmem [shape: bf16[8,8], index: 0, kind: input, shape index: {}]
  %s1 = inlined_call_operand.vmem [shape: f32[8,128], index: 1, kind: input, shape index: {}]
  %s2 = inlined_call_operand.vmem [shape: f32[1,128], index: 2, kind: input, shape index: {}]
  %s3 = inlined_call_operand.hbm [shape: f32[8,128], index: 3, kind: output, shape index: {}]
  %s4 = sld [smem:[#allocation0]]
  $region30: #{_forward_padded.11} parent=0
    _
  %s6 = ssub.s32 1, %s4
  %s7 = scalar_select 0, %s6, %s4
  $region1: #{_forward_padded.11} parent=0
    #allocation3 [shape = 'u8[4096]{0}', space=vmem, size = 0x1000, scoped, tag = 'output window, operand 0, single buffered']
    #allocation4 [shape = 's32[1]{0}', space=sflag, size = 0x4, scoped, tag = 'scoped memory for _forward_padded.11']
    %8 = vsyncpa [#allocation4], 0
    // Predicated region
    $region2: #{_forward_padded.11} parent=1 // pred_check
      _
    $region3: #{_forward_padded.11} parent=1 // pred_check_branch
      %10 = sbr.rel (0) target = $region5
    $region4: #{_forward_padded.11} parent=1 // pred_region
      _
    $region5: #{_forward_padded.11} parent=1 // pred_fallthru
      _
    // Predicated region
    $region6: #{_forward_padded.11} parent=1 // pred_check
      _
    $region7: #{_forward_padded.11} parent=1 // pred_check_branch
      %12 = sbr.rel (0) target = $region9
    $region8: #{_forward_padded.11} parent=1 // pred_region
      _
    $region9: #{_forward_padded.11} parent=1 // pred_fallthru
      _
    // Predicated region
    $region10: #{_forward_padded.11} parent=1 // pred_check
      _
    $region11: #{_forward_padded.11} parent=1 // pred_check_branch
      %14 = sbr.rel (0) target = $region13
    $region12: #{_forward_padded.11} parent=1 // pred_region
      _
    $region13: #{_forward_padded.11} parent=1 // pred_fallthru
      _
    %p15 = scmp.eq.s32.totalorder 0, 0
    // Predicated region
    $region14: #{_forward_padded.11} parent=1 // pred_check
      %p16 = pneg %p15
    $region15: #{_forward_padded.11} parent=1 // pred_check_branch
      %18 = sbr.rel (%p16) target = $region17
    $region16: #{_forward_padded.11} parent=1 // pred_region
      %19 = vst [vmem:[#allocation2] sm:$0xff] 0.0
    $region17: #{_forward_padded.11} parent=1 // pred_fallthru
      _
    %v20 = vld [vmem:[%s0] sm:$0xf]
    %v21 = vunpack.c.l.bf16 %v20
    %v22 = vld [vmem:[#allocation2] sm:$0xff]
    %v23 = vld [vmem:[%s1] sm:$0xff]
    %vm24 = vcmask 64512
    %v26 = vsel %vm24, %v21, 0
    %28 = vmatprep.subr.mxu0 0.0
    %29 = vmatpush1.msra.mxu0 %v23
    %30 = vmatprep.subr.mxu0 0.0
    %31 = vmatpush1.msra.mxu0 0.0
    %32 = vmatprep.subr.mxu0 0.0
    %33 = vmatpush1.msra.mxu0 0.0
    %34 = vmatprep.subr.mxu0 0.0
    %35 = vmatpush1.msra.mxu0 0.0
    %36 = vmatprep.subr.mxu0 0.0
    %37 = vmatpush1.msra.mxu0 0.0
    %38 = vmatprep.subr.mxu0 0.0
    %39 = vmatpush1.msra.mxu0 0.0
    %40 = vmatprep.subr.mxu0 0.0
    %41 = vmatpush1.msra.mxu0 0.0
    %42 = vmatprep.subr.mxu0 0.0
    %43 = vmatpush1.msra.mxu0 0.0
    %44 = vmatprep.subr.mxu0 0.0
    %45 = vmatpush1.msra.mxu0 0.0
    %46 = vmatprep.subr.mxu0 0.0
    %47 = vmatpush1.msra.mxu0 0.0
    %48 = vmatprep.subr.mxu0 0.0
    %49 = vmatpush1.msra.mxu0 0.0
    %50 = vmatprep.subr.mxu0 0.0
    %51 = vmatpush1.msra.mxu0 0.0
    %52 = vmatprep.subr.mxu0 0.0
    %53 = vmatpush1.msra.mxu0 0.0
    %54 = vmatprep.subr.mxu0 0.0
    %55 = vmatpush1.msra.mxu0 0.0
    %56 = vmatprep.subr.mxu0 0.0
    %57 = vmatpush1.msra.mxu0 0.0
    %58 = vmatprep.subr.mxu0 0.0
    %59 = vmatpush1.msra.mxu0 0.0
    %60 = vmatprep.subr.mxu0 0.0
    %61 = vmatpush1.msra.mxu0 0.0
    %62 = vmatprep.subr.mxu0 0.0
    %63 = vmatpush1.msra.mxu0 0.0
    %64 = vmatprep.subr.mxu0 0.0
    %65 = vmatpush1.msra.mxu0 0.0
    %66 = vmatprep.subr.mxu0 0.0
    %67 = vmatpush1.msra.mxu0 0.0
    %68 = vmatprep.subr.mxu0 0.0
    %69 = vmatpush1.msra.mxu0 0.0
    %70 = vmatprep.subr.mxu0 0.0
    %71 = vmatpush1.msra.mxu0 0.0
    %72 = vmatprep.subr.mxu0 0.0
    %73 = vmatpush1.msra.mxu0 0.0
    %74 = vmatprep.subr.mxu0 0.0
    %75 = vmatpush1.msra.mxu0 0.0
    %76 = vmatprep.subr.mxu0 0.0
    %77 = vmatpush1.msra.mxu0 0.0
    %78 = vmatprep.subr.mxu0 0.0
    %79 = vmatpush1.msra.mxu0 0.0
    %80 = vmatprep.subr.mxu0 0.0
    %81 = vmatpush1.msra.mxu0 0.0
    %82 = vmatprep.subr.mxu0 0.0
    %83 = vmatpush1.msra.mxu0 0.0
    %84 = vmatprep.subr.mxu0 0.0
    %85 = vmatpush1.msra.mxu0 0.0
    %86 = vmatprep.subr.mxu0 0.0
    %87 = vmatpush1.msra.mxu0 0.0
    %88 = vmatprep.subr.mxu0 0.0
    %89 = vmatpush1.msra.mxu0 0.0
    %90 = vmatprep.subr.mxu0 0.0
    %91 = vmatpush1.msra.mxu0 0.0
    %92 = vmatprep.mubr.f32.mxu0 0.0
    %93 = vmatmul.mubr.f32.gmra.mrb[0].mxu0 %v26
    %v94 = vpop.f32.mrb[0].mxu0
    %v95 = vadd.f32 0.0, %v94
    %v96 = vpop.f32.mrb[0].mxu0
    %97 = vdwg.mxu0
    %v98 = vadd.f32 %v22, %v95
    %99 = vst [vmem:[#allocation2] sm:$0xff] %v98
    // Predicated region
    $region18: #{_forward_padded.11} parent=1 // pred_check
      %p100 = pneg %p15
    $region19: #{_forward_padded.11} parent=1 // pred_check_branch
      %102 = sbr.rel (%p100) target = $region21
    $region20: #{_forward_padded.11} parent=1 // pred_region
      %v103 = vld [vmem:[#allocation2] sm:$0xff]
      %v104 = vld [vmem:[%s2] sm:$0x1]
      %v106 = vlaneseq
      %v107 = vshrl.u32 %v106, 7
      %v108 = vsub.s32 0, %v107
      %v109 = vrot.slane %v104, %v108
      %v111 = vadd.f32 %v103, %v109
      %vm112 = vcmp.gt.f32.partialorder %v111, 0.0
      %v113 = vmul.f32 %v111, 0.01
      %v114 = vsel %vm112, %v111, %v113
      %115 = vst [vmem:[#allocation3] sm:$0xff] %v114
    $region21: #{_forward_padded.11} parent=1 // pred_fallthru
      _
    // Predicated region
    $region22: #{_forward_padded.11} parent=1 // pred_check
      _
    $region23: #{_forward_padded.11} parent=1 // pred_check_branch
      %117 = sbr.rel (0) target = $region25
    $region24: #{_forward_padded.11} parent=1 // pred_region
      %s119 = ssub.s32 128, 128
      %120 = vsyncadd [#allocation4], %s119
      %s122 = sshll.u32 [#allocation3], 4
      %s123 = int_to_ptr.vmem [resolvable:$true] %s122
      %125 = dma.vmem_to_hbm [thread:$0]  %s123, 128, %s3, [#allocation4]
    $region25: #{_forward_padded.11} parent=1 // pred_fallthru
      _
    // Predicated region
    $region26: #{_forward_padded.11} parent=1 // pred_check
      _
    $region27: #{_forward_padded.11} parent=1 // pred_check_branch
      %127 = sbr.rel (0) target = $region29
    $region28: #{_forward_padded.11} parent=1 // pred_region
      %128 = dma.done [#allocation4], 128
    $region29: #{_forward_padded.11} parent=1 // pred_fallthru
      _
    %129 = vsyncpa [#allocation4], 1

// kernel: _forward_padded.8
$region0: #{_forward_padded.8}
  #allocation0 [shape = 'u32[]', space=smem, size = 0x4, offset = 0x4, fixed_abs, tag = 'smem constant byte address 0x4 - core index']
  #allocation1 [shape = 'u32[144,128]{1,0:T(1,128)}', space=vmem, size = 0x12000, scoped, tag = 'internal scratch']
  %s0 = inlined_call_operand.vmem [shape: f32[8,128], index: 0, kind: input, shape index: {}]
  %s1 = inlined_call_operand.vmem [shape: f32[128,128], index: 1, kind: input, shape index: {}]
  %s2 = inlined_call_operand.vmem [shape: f32[8,128], index: 2, kind: output, shape index: {}]
  %s3 = sld [smem:[#allocation0]]
  $region18: #{_forward_padded.8} parent=0
    _
  %s5 = ssub.s32 1, %s3
  %s6 = scalar_select 0, %s5, %s3
  // Predicated region
  $region2: #{_forward_padded.8} parent=0 // pred_check
    _
  $region3: #{_forward_padded.8} parent=0 // pred_check_branch
    %8 = sbr.rel (0) target = $region5
  $region4: #{_forward_padded.8} parent=0 // pred_region
    _
  $region5: #{_forward_padded.8} parent=0 // pred_fallthru
    _
  // Predicated region
  $region6: #{_forward_padded.8} parent=0 // pred_check
    _
  $region7: #{_forward_padded.8} parent=0 // pred_check_branch
    %10 = sbr.rel (0) target = $region9
  $region8: #{_forward_padded.8} parent=0 // pred_region
    _
  $region9: #{_forward_padded.8} parent=0 // pred_fallthru
    _
  %v11 = vld [vmem:[%s0] sm:$0xff]
  %v12 = vld [vmem:[%s1] sm:$0xff]
  %v13 = vld [vmem:[%s1 + $0x8] sm:$0xff]
  %v14 = vld [vmem:[%s1 + $0x10] sm:$0xff]
  %v15 = vld [vmem:[%s1 + $0x18] sm:$0xff]
  %v16 = vld [vmem:[%s1 + $0x20] sm:$0xff]
  %v17 = vld [vmem:[%s1 + $0x28] sm:$0xff]
  %v18 = vld [vmem:[%s1 + $0x30] sm:$0xff]
  %v19 = vld [vmem:[%s1 + $0x38] sm:$0xff]
  %v20 = vld [vmem:[%s1 + $0x40] sm:$0xff]
  %v21 = vld [vmem:[%s1 + $0x48] sm:$0xff]
  %v22 = vld [vmem:[%s1 + $0x50] sm:$0xff]
  %v23 = vld [vmem:[%s1 + $0x58] sm:$0xff]
  %v24 = vld [vmem:[%s1 + $0x60] sm:$0xff]
  %v25 = vld [vmem:[%s1 + $0x68] sm:$0xff]
  %v26 = vld [vmem:[%s1 + $0x70] sm:$0xff]
  %v27 = vld [vmem:[%s1 + $0x78] sm:$0xff]
  %28 = vmatprep.subr.mxu0 0.0
  %29 = vmatpush1.msra.mxu0 %v12
  %30 = vmatprep.subr.mxu0 0.0
  %31 = vmatpush1.msra.mxu0 %v13
  %32 = vmatprep.subr.mxu0 0.0
  %33 = vmatpush1.msra.mxu0 %v14
  %34 = vmatprep.subr.mxu0 0.0
  %35 = vmatpush1.msra.mxu0 %v15
  %36 = vmatprep.subr.mxu0 0.0
  %37 = vmatpush1.msra.mxu0 %v16
  %38 = vmatprep.subr.mxu0 0.0
  %39 = vmatpush1.msra.mxu0 %v17
  %40 = vmatprep.subr.mxu0 0.0
  %41 = vmatpush1.msra.mxu0 %v18
  %42 = vmatprep.subr.mxu0 0.0
  %43 = vmatpush1.msra.mxu0 %v19
  %44 = vmatprep.subr.mxu0 0.0
  %45 = vmatpush1.msra.mxu0 %v20
  %46 = vmatprep.subr.mxu0 0.0
  %47 = vmatpush1.msra.mxu0 %v21
  %48 = vmatprep.subr.mxu0 0.0
  %49 = vmatpush1.msra.mxu0 %v22
  %50 = vmatprep.subr.mxu0 0.0
  %51 = vmatpush1.msra.mxu0 %v23
  %52 = vmatprep.subr.mxu0 0.0
  %53 = vmatpush1.msra.mxu0 %v24
  %54 = vmatprep.subr.mxu0 0.0
  %55 = vmatpush1.msra.mxu0 %v25
  %56 = vmatprep.subr.mxu0 0.0
  %57 = vmatpush1.msra.mxu0 %v26
  %58 = vmatprep.subr.mxu0 0.0
  %59 = vmatpush1.msra.mxu0 %v27
  %60 = vmatprep.subr.mxu0 0.0
  %61 = vmatpush1.msra.mxu0 0.0
  %62 = vmatprep.subr.mxu0 0.0
  %63 = vmatpush1.msra.mxu0 0.0
  %64 = vmatprep.subr.mxu0 0.0
  %65 = vmatpush1.msra.mxu0 0.0
  %66 = vmatprep.subr.mxu0 0.0
  %67 = vmatpush1.msra.mxu0 0.0
  %68 = vmatprep.subr.mxu0 0.0
  %69 = vmatpush1.msra.mxu0 0.0
  %70 = vmatprep.subr.mxu0 0.0
  %71 = vmatpush1.msra.mxu0 0.0
  %72 = vmatprep.subr.mxu0 0.0
  %73 = vmatpush1.msra.mxu0 0.0
  %74 = vmatprep.subr.mxu0 0.0
  %75 = vmatpush1.msra.mxu0 0.0
  %76 = vmatprep.subr.mxu0 0.0
  %77 = vmatpush1.msra.mxu0 0.0
  %78 = vmatprep.subr.mxu0 0.0
  %79 = vmatpush1.msra.mxu0 0.0
  %80 = vmatprep.subr.mxu0 0.0
  %81 = vmatpush1.msra.mxu0 0.0
  %82 = vmatprep.subr.mxu0 0.0
  %83 = vmatpush1.msra.mxu0 0.0
  %84 = vmatprep.subr.mxu0 0.0
  %85 = vmatpush1.msra.mxu0 0.0
  %86 = vmatprep.subr.mxu0 0.0
  %87 = vmatpush1.msra.mxu0 0.0
  %88 = vmatprep.subr.mxu0 0.0
  %89 = vmatpush1.msra.mxu0 0.0
  %90 = vmatprep.subr.mxu0 0.0
  %91 = vmatpush1.msra.mxu0 0.0
  %92 = vmatprep.mubr.f32.mxu0 0.0
  %93 = vmatmul.mubr.f32.gmra.mrb[0].mxu0 %v11
  %v94 = vpop.f32.mrb[0].mxu0
  %v95 = vadd.f32 0.0, %v94
  %v96 = vpop.f32.mrb[0].mxu0
  %97 = vdwg.mxu0
  %98 = vst [vmem:[%s2] sm:$0xff] %v95
  // Predicated region
  $region10: #{_forward_padded.8} parent=0 // pred_check
    _
  $region11: #{_forward_padded.8} parent=0 // pred_check_branch
    %100 = sbr.rel (0) target = $region13
  $region12: #{_forward_padded.8} parent=0 // pred_region
    _
  $region13: #{_forward_padded.8} parent=0 // pred_fallthru
    _
  // Predicated region
  $region14: #{_forward_padded.8} parent=0 // pred_check
    _
  $region15: #{_forward_padded.8} parent=0 // pred_check_branch
    %102 = sbr.rel (0) target = $region17
  $region16: #{_forward_padded.8} parent=0 // pred_region
    _
  $region17: #{_forward_padded.8} parent=0 // pred_fallthru
    _

</llo_original>
